<compile_context>
chip_gen: v6e
topology: v6e:2x2x1
jax: 0.10.0
libtpu: 0.0.40
codegen_flags: <defaults>
</compile_context>

<pallas_src>
import jax
import jax.numpy as jnp
from jax import lax
from jax.experimental import pallas as pl
from jax.experimental.pallas import tpu as pltpu

# ---- problem sizes (small, consistent with the module) ----
N = 2            # batch
C_IN = 6         # Conv1d in_channels
C_OUT = 12       # Conv1d out_channels
K = 50           # kernel_size
PAD = 25         # padding
L = 127          # input length -> output length L + 2*25 - 50 + 1 = 128 (lane aligned)
L_PAD = L + 2 * PAD           # 177
L_OUT = L + 2 * PAD - K + 1   # 128
CK = C_IN * K                 # 300 (im2col contraction depth)
CK1 = CK + 1                  # 301 (with the bias row folded in)
NL = N * L_OUT                # 256 (batch concatenated along lanes)

LEAKY_SLOPE = 0.01
BN_EPS = 1e-5


def upscaler_kernel(xcol_ref, w_ref, p_ref, o_ref):
    """Whole batch in one invocation (no grid).

    xcol_ref: (CK1, NL)      im2col input + constant-1 bias row, batch on lanes
    w_ref:    (C_OUT, CK1)   flattened conv weight with bias as last column
    p_ref:    (2, C_OUT, 1)  [bn scale; bn shift]
    o_ref:    (C_OUT, NL)
    """
    # Single im2col matmul on the MXU (f32 accumulation); conv bias is the
    # last column of w_ref times the constant-1 row of xcol_ref.
    y = jnp.dot(w_ref[...], xcol_ref[...], preferred_element_type=jnp.float32)

    # LeakyReLU (negative_slope=0.01): valid since slope in (0, 1).
    y = jnp.maximum(y, LEAKY_SLOPE * y)

    # Dropout1d(p=0.1): identity in eval mode.
    # TODO(synk): training-mode channel dropout would need pltpu.prng_* masking.

    # BatchNorm1d(12) in eval mode (running stats folded into scale/shift);
    # channel on sublanes -> lane broadcast is free.
    y = y * p_ref[0] + p_ref[1]

    o_ref[...] = y.astype(o_ref.dtype)


def upscaling_cnn_forward(x, w, b, gamma, beta, running_mean, running_var):
    """x: (N, C_IN, L) float32 -> (N, C_OUT, L_OUT) float32."""
    # Fold batchnorm running stats + affine into per-channel scale/shift (glue).
    scale = gamma / jnp.sqrt(running_var + BN_EPS)          # (C_OUT,)
    shift = beta - scale * running_mean                     # (C_OUT,)
    params = jnp.stack([scale, shift], axis=0).astype(jnp.float32)
    params = params.reshape(2, C_OUT, 1)

    # --- wrapper-side im2col via 50 static slices (no gather HLO) ---
    x_pad = jnp.pad(x, ((0, 0), (0, 0), (PAD, PAD)))                 # (N, C_IN, L_PAD)
    cols = jnp.stack([x_pad[:, :, k:k + L_OUT] for k in range(K)],
                     axis=2)                                         # (N, C_IN, K, L_OUT)
    x_col = cols.reshape(N, CK, L_OUT)                               # (N, 300, 128)
    x_big = jnp.transpose(x_col, (1, 0, 2)).reshape(CK, NL)          # (300, 256)
    x_big = x_big.astype(jnp.float32)
    # append constant-1 row so the conv bias rides the matmul (301, 256)
    x_aug = jnp.concatenate([x_big, jnp.ones((1, NL), jnp.float32)], axis=0)

    # flattened weight with bias as the last column: (12, 301)
    w_flat = w.reshape(C_OUT, CK).astype(jnp.float32)
    w_aug = jnp.concatenate([w_flat, b.reshape(C_OUT, 1).astype(jnp.float32)], axis=1)

    y_big = pl.pallas_call(
        upscaler_kernel,
        out_shape=jax.ShapeDtypeStruct((C_OUT, NL), jnp.float32),
        in_specs=[
            pl.BlockSpec(memory_space=pltpu.MemorySpace.VMEM),
            pl.BlockSpec(memory_space=pltpu.MemorySpace.VMEM),
            pl.BlockSpec(memory_space=pltpu.MemorySpace.VMEM),
        ],
        out_specs=pl.BlockSpec(memory_space=pltpu.MemorySpace.VMEM),
        cost_estimate=pl.CostEstimate(
            flops=2 * C_OUT * CK1 * NL,
            transcendentals=0,
            bytes_accessed=4 * (CK1 * NL + C_OUT * CK1 + 2 * C_OUT + C_OUT * NL),
        ),
    )(x_aug, w_aug, params)

    # Un-concatenate the batch from the lane axis: (12, 256) -> (N, 12, 128)
    out = jnp.transpose(y_big.reshape(C_OUT, N, L_OUT), (1, 0, 2))

    # specializationModel: user-supplied submodule, unknown -> identity passthrough.
    # TODO(synk): plug an actual specializationModel forward here if one is defined.
    # TODO(synk): on v7x (2 TCs) a parallel batch grid axis would run the two
    # batch elements concurrently; at N=2 the single fused block is fine everywhere.
    return out


def reference_forward(x, w, b, gamma, beta, running_mean, running_var):
    """Pure-JAX reference (lax conv) for correctness checking."""
    y = lax.conv_general_dilated(
        x, w,
        window_strides=(1,),
        padding=[(PAD, PAD)],
        dimension_numbers=("NCH", "OIH", "NCH"),
    ) + b.reshape(1, C_OUT, 1)
    y = jnp.where(y >= 0, y, LEAKY_SLOPE * y)
    scale = gamma / jnp.sqrt(running_var + BN_EPS)
    shift = beta - scale * running_mean
    return y * scale.reshape(1, C_OUT, 1) + shift.reshape(1, C_OUT, 1)


if __name__ == "__main__":
    key = jax.random.PRNGKey(0)
    kx, kw, kb, kg, kbeta = jax.random.split(key, 5)

    # deterministic parameter init (shapes from nn.Conv1d(6,12,50) / nn.BatchNorm1d(12))
    x = jax.random.normal(kx, (N, C_IN, L), dtype=jnp.float32)
    w = jax.random.normal(kw, (C_OUT, C_IN, K), dtype=jnp.float32) * 0.05
    b = jax.random.normal(kb, (C_OUT,), dtype=jnp.float32) * 0.05
    gamma = 1.0 + 0.1 * jax.random.normal(kg, (C_OUT,), dtype=jnp.float32)
    beta = 0.1 * jax.random.normal(kbeta, (C_OUT,), dtype=jnp.float32)
    running_mean = jnp.zeros((C_OUT,), dtype=jnp.float32)   # fresh BatchNorm1d stats
    running_var = jnp.ones((C_OUT,), dtype=jnp.float32)

    out = upscaling_cnn_forward(x, w, b, gamma, beta, running_mean, running_var)
    out = jax.block_until_ready(out)

    ref = reference_forward(x, w, b, gamma, beta, running_mean, running_var)
    assert out.shape == (N, C_OUT, L_OUT), out.shape
    assert jnp.allclose(out, ref, atol=1e-4, rtol=1e-4), float(jnp.max(jnp.abs(out - ref)))

    print("KERNEL_OK")
</pallas_src>

<mosaic_0001>
module attributes {stable_mosaic.version = 11 : i64} {
  func.func @upscaler_kernel(%arg0: memref<301x256xf32, #tpu.memory_space<vmem>>, %arg1: memref<12x301xf32, #tpu.memory_space<vmem>>, %arg2: memref<2x12x1xf32, #tpu.memory_space<vmem>>, %arg3: memref<12x256xf32, #tpu.memory_space<vmem>>) attributes {dimension_semantics = [], scalar_prefetch = 0 : i64, scratch_operands = 0 : i64, tpu.core_type = #tpu.core_type<tc>} {
    %c0 = arith.constant 0 : index
    %c0_0 = arith.constant 0 : index
    %0 = vector.load %arg1[%c0, %c0_0] : memref<12x301xf32, #tpu.memory_space<vmem>>, vector<12x301xf32>
    %c0_1 = arith.constant 0 : index
    %c0_2 = arith.constant 0 : index
    %1 = vector.load %arg0[%c0_1, %c0_2] : memref<301x256xf32, #tpu.memory_space<vmem>>, vector<301x256xf32>
    %cst = arith.constant dense<0.000000e+00> : vector<12x256xf32>
    %2 = tpu.matmul %0, %1, %cst {dimension_numbers = #tpu.dot_dimension_numbers<[1], [0], [0], [1], [0, 0, 1, 1], [], []>} : vector<12x301xf32>, vector<301x256xf32>, vector<12x256xf32> -> vector<12x256xf32>
    %cst_3 = arith.constant 0.00999999977 : f32
    %3 = vector.broadcast %cst_3 : f32 to vector<12x256xf32>
    %4 = arith.mulf %3, %2 : vector<12x256xf32>
    %5 = arith.maximumf %2, %4 : vector<12x256xf32>
    %c0_4 = arith.constant 0 : index
    %c0_5 = arith.constant 0 : index
    %c0_6 = arith.constant 0 : index
    %6 = vector.load %arg2[%c0_4, %c0_5, %c0_6] : memref<2x12x1xf32, #tpu.memory_space<vmem>>, vector<1x12x1xf32>
    %7 = vector.shape_cast %6 : vector<1x12x1xf32> to vector<12x1xf32>
    %8 = vector.broadcast %7 : vector<12x1xf32> to vector<12x256xf32>
    %9 = arith.mulf %5, %8 : vector<12x256xf32>
    %c1 = arith.constant 1 : index
    %c0_7 = arith.constant 0 : index
    %c0_8 = arith.constant 0 : index
    %10 = vector.load %arg2[%c1, %c0_7, %c0_8] : memref<2x12x1xf32, #tpu.memory_space<vmem>>, vector<1x12x1xf32>
    %11 = vector.shape_cast %10 : vector<1x12x1xf32> to vector<12x1xf32>
    %12 = vector.broadcast %11 : vector<12x1xf32> to vector<12x256xf32>
    %13 = arith.addf %9, %12 : vector<12x256xf32>
    %c0_9 = arith.constant 0 : index
    %c0_10 = arith.constant 0 : index
    %14 = vector.load %arg3[%c0_9, %c0_10] : memref<12x256xf32, #tpu.memory_space<vmem>>, vector<12x256xf32>
    tpu.vector_store %arg3[%c0_9, %c0_10], %13 {strides = array<i32>} : memref<12x256xf32, #tpu.memory_space<vmem>>, vector<12x256xf32>,
    return
  }
}

</mosaic_0001>

<llo_original>
// kernel: tpu_custom_call.1
$region0: #{tpu_custom_call.1}
  #allocation0 [shape = 'u32[]', space=smem, size = 0x4, offset = 0x4, fixed_abs, tag = 'smem constant byte address 0x4 - core index']
  #allocation1 [shape = 'u32[144,128]{1,0:T(1,128)}', space=vmem, size = 0x12000, scoped, tag = 'internal scratch']
  %s0 = inlined_call_operand.hbm [shape: f32[301,256], index: 0, kind: input, shape index: {}]
  %s1 = inlined_call_operand.hbm [shape: f32[12,301], index: 1, kind: input, shape index: {}]
  %s2 = inlined_call_operand.vmem [shape: f32[2,12,1], index: 2, kind: input, shape index: {}]
  %s3 = inlined_call_operand.hbm [shape: f32[12,256], index: 3, kind: output, shape index: {}]
  %s4 = sld [smem:[#allocation0]]
  $region30: #{tpu_custom_call.1} parent=0
    _
  %s6 = ssub.s32 1, %s4
  %s7 = scalar_select 0, %s6, %s4
  $region1: #{tpu_custom_call.1} parent=0
    #allocation2 [shape = 'u8[311296]{0}', space=vmem, size = 0x4c000, scoped, tag = 'input window, operand 0, single buffered']
    #allocation3 [shape = 's32[1]{0}', space=sflag, size = 0x4, scoped, tag = 'scoped memory for tpu_custom_call.1']
    #allocation4 [shape = 's32[1]{0}', space=sflag, size = 0x4, scoped, tag = 'scoped memory for tpu_custom_call.1']
    #allocation5 [shape = 'u8[24576]{0}', space=vmem, size = 0x6000, scoped, tag = 'input window, operand 1, single buffered']
    #allocation6 [shape = 's32[1]{0}', space=sflag, size = 0x4, scoped, tag = 'scoped memory for tpu_custom_call.1']
    #allocation7 [shape = 'u8[16384]{0}', space=vmem, size = 0x4000, scoped, tag = 'output window, operand 0, single buffered']
    %8 = vsyncpa [#allocation3], 0
    %9 = vsyncpa [#allocation6], 0
    %10 = vsyncpa [#allocation4], 0
    // Predicated region
    $region2: #{tpu_custom_call.1} parent=1 // pred_check
      _
    $region3: #{tpu_custom_call.1} parent=1 // pred_check_branch
      %12 = sbr.rel (0) target = $region5
    $region4: #{tpu_custom_call.1} parent=1 // pred_region
      %s14 = ssub.s32 9728, 9728
      %15 = vsyncadd [#allocation3], %s14
      %s16 = sshll.u32 [#allocation2], 4
      %s17 = int_to_ptr.vmem [resolvable:$true] %s16
      %22 = dma.hbm_to_vmem [thread:$0]  %s0, 9728, %s17, [#allocation3], 256, 256, 16
    $region5: #{tpu_custom_call.1} parent=1 // pred_fallthru
      _
    // Predicated region
    $region6: #{tpu_custom_call.1} parent=1 // pred_check
      _
    $region7: #{tpu_custom_call.1} parent=1 // pred_check_branch
      %24 = sbr.rel (0) target = $region9
    $region8: #{tpu_custom_call.1} parent=1 // pred_region
      %s26 = ssub.s32 768, 768
      %27 = vsyncadd [#allocation6], %s26
      %s28 = sshll.u32 [#allocation5], 4
      %s29 = int_to_ptr.vmem [resolvable:$true] %s28
      %34 = dma.hbm_to_vmem [thread:$0]  %s1, 768, %s29, [#allocation6], 384, 384, 24
    $region9: #{tpu_custom_call.1} parent=1 // pred_fallthru
      _
    // Predicated region
    $region10: #{tpu_custom_call.1} parent=1 // pred_check
      _
    $region11: #{tpu_custom_call.1} parent=1 // pred_check_branch
      %36 = sbr.rel (0) target = $region13
    $region12: #{tpu_custom_call.1} parent=1 // pred_region
      _
    $region13: #{tpu_custom_call.1} parent=1 // pred_fallthru
      _
    // Predicated region
    $region14: #{tpu_custom_call.1} parent=1 // pred_check
      _
    $region15: #{tpu_custom_call.1} parent=1 // pred_check_branch
      %38 = sbr.rel (0) target = $region17
    $region16: #{tpu_custom_call.1} parent=1 // pred_region
      %39 = dma.done [#allocation3], 9728
    $region17: #{tpu_custom_call.1} parent=1 // pred_fallthru
      _
    // Predicated region
    $region18: #{tpu_custom_call.1} parent=1 // pred_check
      _
    $region19: #{tpu_custom_call.1} parent=1 // pred_check_branch
      %41 = sbr.rel (0) target = $region21
    $region20: #{tpu_custom_call.1} parent=1 // pred_region
      %42 = dma.done [#allocation6], 768
    $region21: #{tpu_custom_call.1} parent=1 // pred_fallthru
      _
    %v43 = vld [vmem:[#allocation5] sm:$0xff]
    %v44 = vld [vmem:[#allocation5 + $0x8] sm:$0xff]
    %v45 = vld [vmem:[#allocation5 + $0x10] sm:$0xff]
    %v46 = vld [vmem:[#allocation5 + $0x18] sm:$0xf]
    %v47 = vld [vmem:[#allocation5 + $0x20] sm:$0xf]
    %v48 = vld [vmem:[#allocation5 + $0x28] sm:$0xf]
    %v49 = vld [vmem:[#allocation2] sm:$0xff]
    %v50 = vld [vmem:[#allocation2 + $0x8] sm:$0xff]
    %v51 = vld [vmem:[#allocation2 + $0x10] sm:$0xff]
    %v52 = vld [vmem:[#allocation2 + $0x18] sm:$0xff]
    %v53 = vld [vmem:[#allocation2 + $0x20] sm:$0xff]
    %v54 = vld [vmem:[#allocation2 + $0x28] sm:$0xff]
    %v55 = vld [vmem:[#allocation2 + $0x30] sm:$0xff]
    %v56 = vld [vmem:[#allocation2 + $0x38] sm:$0xff]
    %v57 = vld [vmem:[#allocation2 + $0x40] sm:$0xff]
    %v58 = vld [vmem:[#allocation2 + $0x48] sm:$0xff]
    %v59 = vld [vmem:[#allocation2 + $0x50] sm:$0xff]
    %v60 = vld [vmem:[#allocation2 + $0x58] sm:$0xff]
    %v61 = vld [vmem:[#allocation2 + $0x60] sm:$0xff]
    %v62 = vld [vmem:[#allocation2 + $0x68] sm:$0xff]
    %v63 = vld [vmem:[#allocation2 + $0x70] sm:$0xff]
    %v64 = vld [vmem:[#allocation2 + $0x78] sm:$0xff]
    %v65 = vld [vmem:[#allocation2 + $0x80] sm:$0xff]
    %v66 = vld [vmem:[#allocation2 + $0x88] sm:$0xff]
    %v67 = vld [vmem:[#allocation2 + $0x90] sm:$0xff]
    %v68 = vld [vmem:[#allocation2 + $0x98] sm:$0xff]
    %v69 = vld [vmem:[#allocation2 + $0xa0] sm:$0xff]
    %v70 = vld [vmem:[#allocation2 + $0xa8] sm:$0xff]
    %v71 = vld [vmem:[#allocation2 + $0xb0] sm:$0xff]
    %v72 = vld [vmem:[#allocation2 + $0xb8] sm:$0xff]
    %v73 = vld [vmem:[#allocation2 + $0xc0] sm:$0xff]
    %v74 = vld [vmem:[#allocation2 + $0xc8] sm:$0xff]
    %v75 = vld [vmem:[#allocation2 + $0xd0] sm:$0xff]
    %v76 = vld [vmem:[#allocation2 + $0xd8] sm:$0xff]
    %v77 = vld [vmem:[#allocation2 + $0xe0] sm:$0xff]
    %v78 = vld [vmem:[#allocation2 + $0xe8] sm:$0xff]
    %v79 = vld [vmem:[#allocation2 + $0xf0] sm:$0xff]
    %v80 = vld [vmem:[#allocation2 + $0xf8] sm:$0xff]
    %v81 = vld [vmem:[#allocation2 + $0x100] sm:$0xff]
    %v82 = vld [vmem:[#allocation2 + $0x108] sm:$0xff]
    %v83 = vld [vmem:[#allocation2 + $0x110] sm:$0xff]
    %v84 = vld [vmem:[#allocation2 + $0x118] sm:$0xff]
    %v85 = vld [vmem:[#allocation2 + $0x120] sm:$0xff]
    %v86 = vld [vmem:[#allocation2 + $0x128] sm:$0xff]
    %v87 = vld [vmem:[#allocation2 + $0x130] sm:$0xff]
    %v88 = vld [vmem:[#allocation2 + $0x138] sm:$0xff]
    %v89 = vld [vmem:[#allocation2 + $0x140] sm:$0xff]
    %v90 = vld [vmem:[#allocation2 + $0x148] sm:$0xff]
    %v91 = vld [vmem:[#allocation2 + $0x150] sm:$0xff]
    %v92 = vld [vmem:[#allocation2 + $0x158] sm:$0xff]
    %v93 = vld [vmem:[#allocation2 + $0x160] sm:$0xff]
    %v94 = vld [vmem:[#allocation2 + $0x168] sm:$0xff]
    %v95 = vld [vmem:[#allocation2 + $0x170] sm:$0xff]
    %v96 = vld [vmem:[#allocation2 + $0x178] sm:$0xff]
    %v97 = vld [vmem:[#allocation2 + $0x180] sm:$0xff]
    %v98 = vld [vmem:[#allocation2 + $0x188] sm:$0xff]
    %v99 = vld [vmem:[#allocation2 + $0x190] sm:$0xff]
    %v100 = vld [vmem:[#allocation2 + $0x198] sm:$0xff]
    %v101 = vld [vmem:[#allocation2 + $0x1a0] sm:$0xff]
    %v102 = vld [vmem:[#allocation2 + $0x1a8] sm:$0xff]
    %v103 = vld [vmem:[#allocation2 + $0x1b0] sm:$0xff]
    %v104 = vld [vmem:[#allocation2 + $0x1b8] sm:$0xff]
    %v105 = vld [vmem:[#allocation2 + $0x1c0] sm:$0xff]
    %v106 = vld [vmem:[#allocation2 + $0x1c8] sm:$0xff]
    %v107 = vld [vmem:[#allocation2 + $0x1d0] sm:$0xff]
    %v108 = vld [vmem:[#allocation2 + $0x1d8] sm:$0xff]
    %v109 = vld [vmem:[#allocation2 + $0x1e0] sm:$0xff]
    %v110 = vld [vmem:[#allocation2 + $0x1e8] sm:$0xff]
    %v111 = vld [vmem:[#allocation2 + $0x1f0] sm:$0xff]
    %v112 = vld [vmem:[#allocation2 + $0x1f8] sm:$0xff]
    %v113 = vld [vmem:[#allocation2 + $0x200] sm:$0xff]
    %v114 = vld [vmem:[#allocation2 + $0x208] sm:$0xff]
    %v115 = vld [vmem:[#allocation2 + $0x210] sm:$0xff]
    %v116 = vld [vmem:[#allocation2 + $0x218] sm:$0xff]
    %v117 = vld [vmem:[#allocation2 + $0x220] sm:$0xff]
    %v118 = vld [vmem:[#allocation2 + $0x228] sm:$0xff]
    %v119 = vld [vmem:[#allocation2 + $0x230] sm:$0xff]
    %v120 = vld [vmem:[#allocation2 + $0x238] sm:$0xff]
    %v121 = vld [vmem:[#allocation2 + $0x240] sm:$0xff]
    %v122 = vld [vmem:[#allocation2 + $0x248] sm:$0xff]
    %v123 = vld [vmem:[#allocation2 + $0x250] sm:$0x1f]
    %v124 = vld [vmem:[#allocation2 + $0x258] sm:$0x1f]
    %vm125 = vcmask 367616
    %v127 = vsel %vm125, %v45, 0
    %v130 = vsel %vm125, %v48, 0
    %vm132 = vcmask 1044480
    %v134 = vsel %vm132, %v123, 0
    %v137 = vsel %vm132, %v124, 0
    %139 = vmatprep.subr.mxu0 %v80
    %140 = vmatpush1.msra.mxu0 %v79
    %141 = vmatprep.subr.mxu0 %v78
    %142 = vmatpush1.msra.mxu0 %v77
    %143 = vmatprep.subr.mxu0 %v76
    %144 = vmatpush1.msra.mxu0 %v75
    %145 = vmatprep.subr.mxu0 %v74
    %146 = vmatpush1.msra.mxu0 %v73
    %147 = vmatprep.subr.mxu0 %v72
    %148 = vmatpush1.msra.mxu0 %v71
    %149 = vmatprep.subr.mxu0 %v70
    %150 = vmatpush1.msra.mxu0 %v69
    %151 = vmatprep.subr.mxu0 %v68
    %152 = vmatpush1.msra.mxu0 %v67
    %153 = vmatprep.subr.mxu0 %v66
    %154 = vmatpush1.msra.mxu0 %v65
    %155 = vmatprep.subr.mxu0 %v64
    %156 = vmatpush1.msra.mxu0 %v63
    %157 = vmatprep.subr.mxu0 %v62
    %158 = vmatpush1.msra.mxu0 %v61
    %159 = vmatprep.subr.mxu0 %v60
    %160 = vmatpush1.msra.mxu0 %v59
    %161 = vmatprep.subr.mxu0 %v58
    %162 = vmatpush1.msra.mxu0 %v57
    %163 = vmatprep.subr.mxu0 %v56
    %164 = vmatpush1.msra.mxu0 %v55
    %165 = vmatprep.subr.mxu0 %v54
    %166 = vmatpush1.msra.mxu0 %v53
    %167 = vmatprep.subr.mxu0 %v52
    %168 = vmatpush1.msra.mxu0 %v51
    %169 = vmatprep.subr.mxu0 %v50
    %170 = vmatpush1.msra.mxu0 %v49
    %171 = vmatprep.subr.mxu0 %v112
    %172 = vmatpush2.msra.mxu0 %v111
    %173 = vmatprep.subr.mxu0 %v110
    %174 = vmatpush2.msra.mxu0 %v109
    %175 = vmatprep.subr.mxu0 %v108
    %176 = vmatpush2.msra.mxu0 %v107
    %177 = vmatprep.subr.mxu0 %v106
    %178 = vmatpush2.msra.mxu0 %v105
    %179 = vmatprep.subr.mxu0 %v104
    %180 = vmatpush2.msra.mxu0 %v103
    %181 = vmatprep.subr.mxu0 %v102
    %182 = vmatpush2.msra.mxu0 %v101
    %183 = vmatprep.subr.mxu0 %v100
    %184 = vmatpush2.msra.mxu0 %v99
    %185 = vmatprep.subr.mxu0 %v98
    %186 = vmatpush2.msra.mxu0 %v97
    %187 = vmatprep.subr.mxu0 %v96
    %188 = vmatpush2.msra.mxu0 %v95
    %189 = vmatprep.subr.mxu0 %v94
    %190 = vmatpush2.msra.mxu0 %v93
    %191 = vmatprep.subr.mxu0 %v92
    %192 = vmatpush2.msra.mxu0 %v91
    %193 = vmatprep.subr.mxu0 %v90
    %194 = vmatpush2.msra.mxu0 %v89
    %195 = vmatprep.subr.mxu0 %v88
    %196 = vmatpush2.msra.mxu0 %v87
    %197 = vmatprep.subr.mxu0 %v86
    %198 = vmatpush2.msra.mxu0 %v85
    %199 = vmatprep.subr.mxu0 %v84
    %200 = vmatpush2.msra.mxu0 %v83
    %201 = vmatprep.subr.mxu0 %v82
    %202 = vmatpush2.msra.mxu0 %v81
    %203 = vmatprep.mubr.f32.mxu0 %v44
    %204 = vmatmul.mubr.f32.gmra.mxu0 %v43
    %v205 = vpop.f32.mrf.mxu0
    %v206 = vadd.f32 0.0, %v205
    %v207 = vpop.f32.mrf.mxu0
    %v208 = vadd.f32 0.0, %v207
    %209 = vmatprep.mubr.f32.mxu0 %v47
    %210 = vmatmul.mubr.f32.gmra.mxu0 %v46
    %v211 = vpop.f32.mrf.mxu0
    %v212 = vadd.f32 0.0, %v211
    %v213 = vpop.f32.mrf.mxu0
    %v214 = vadd.f32 0.0, %v213
    %215 = vdwg.mxu0
    %216 = vmatprep.subr.mxu0 0.0
    %217 = vmatpush1.msra.mxu0 0.0
    %218 = vmatprep.subr.mxu0 0.0
    %219 = vmatpush1.msra.mxu0 0.0
    %220 = vmatprep.subr.mxu0 0.0
    %221 = vmatpush1.msra.mxu0 0.0
    %222 = vmatprep.subr.mxu0 0.0
    %223 = vmatpush1.msra.mxu0 0.0
    %224 = vmatprep.subr.mxu0 0.0
    %225 = vmatpush1.msra.mxu0 0.0
    %226 = vmatprep.subr.mxu0 0.0
    %227 = vmatpush1.msra.mxu0 0.0
    %228 = vmatprep.subr.mxu0 0.0
    %229 = vmatpush1.msra.mxu0 0.0
    %230 = vmatprep.subr.mxu0 0.0
    %231 = vmatpush1.msra.mxu0 0.0
    %232 = vmatprep.subr.mxu0 0.0
    %233 = vmatpush1.msra.mxu0 0.0
    %234 = vmatprep.subr.mxu0 0.0
    %235 = vmatpush1.msra.mxu0 0.0
    %236 = vmatprep.subr.mxu0 %v137
    %237 = vmatpush1.msra.mxu0 %v134
    %238 = vmatprep.subr.mxu0 %v122
    %239 = vmatpush1.msra.mxu0 %v121
    %240 = vmatprep.subr.mxu0 %v120
    %241 = vmatpush1.msra.mxu0 %v119
    %242 = vmatprep.subr.mxu0 %v118
    %243 = vmatpush1.msra.mxu0 %v117
    %244 = vmatprep.subr.mxu0 %v116
    %245 = vmatpush1.msra.mxu0 %v115
    %246 = vmatprep.subr.mxu0 %v114
    %247 = vmatpush1.msra.mxu0 %v113
    %248 = vmatprep.subr.mxu0 0.0
    %249 = vmatpush2.msra.mxu0 0.0
    %250 = vmatprep.subr.mxu0 0.0
    %251 = vmatpush2.msra.mxu0 0.0
    %252 = vmatprep.subr.mxu0 0.0
    %253 = vmatpush2.msra.mxu0 0.0
    %254 = vmatprep.subr.mxu0 0.0
    %255 = vmatpush2.msra.mxu0 0.0
    %256 = vmatprep.subr.mxu0 0.0
    %257 = vmatpush2.msra.mxu0 0.0
    %258 = vmatprep.subr.mxu0 0.0
    %259 = vmatpush2.msra.mxu0 0.0
    %260 = vmatprep.subr.mxu0 0.0
    %261 = vmatpush2.msra.mxu0 0.0
    %262 = vmatprep.subr.mxu0 0.0
    %263 = vmatpush2.msra.mxu0 0.0
    %264 = vmatprep.subr.mxu0 0.0
    %265 = vmatpush2.msra.mxu0 0.0
    %266 = vmatprep.subr.mxu0 0.0
    %267 = vmatpush2.msra.mxu0 0.0
    %268 = vmatprep.subr.mxu0 0.0
    %269 = vmatpush2.msra.mxu0 0.0
    %270 = vmatprep.subr.mxu0 0.0
    %271 = vmatpush2.msra.mxu0 0.0
    %272 = vmatprep.subr.mxu0 0.0
    %273 = vmatpush2.msra.mxu0 0.0
    %274 = vmatprep.subr.mxu0 0.0
    %275 = vmatpush2.msra.mxu0 0.0
    %276 = vmatprep.subr.mxu0 0.0
    %277 = vmatpush2.msra.mxu0 0.0
    %278 = vmatprep.subr.mxu0 0.0
    %279 = vmatpush2.msra.mxu0 0.0
    %280 = vmatprep.mubr.f32.mxu0 0.0
    %281 = vmatmul.mubr.f32.gmra.mxu0 %v127
    %v282 = vpop.f32.mrf.mxu0
    %v283 = vadd.f32 %v206, %v282
    %v284 = vpop.f32.mrf.mxu0
    %v285 = vadd.f32 %v208, %v284
    %286 = vmatprep.mubr.f32.mxu0 0.0
    %287 = vmatmul.mubr.f32.gmra.mxu0 %v130
    %v288 = vpop.f32.mrf.mxu0
    %v289 = vadd.f32 %v212, %v288
    %v290 = vpop.f32.mrf.mxu0
    %v291 = vadd.f32 %v214, %v290
    %292 = vdwg.mxu0
    %v293 = vmul.f32 %v283, 0.01
    %v294 = vmul.f32 %v285, 0.01
    %v295 = vmul.f32 %v289, 0.01
    %v296 = vmul.f32 %v291, 0.01
    %v297 = vmax.f32 %v283, %v293
    %v298 = vmax.f32 %v285, %v294
    %v299 = vmax.f32 %v289, %v295
    %v300 = vmax.f32 %v291, %v296
    %v301 = vld [vmem:[%s2] sm:$0xff]
    %v302 = vld [vmem:[%s2 + $0x8] sm:$0xf]
    %304 = vset.pattern.permute.xlu0 0
    %305 = vperm.xlu0 %304, %v301
    %v306 = vpop.permute.xlu0 %305
    %309 = vset.pattern.permute.xlu0 0
    %310 = vperm.xlu0 %309, %v302
    %v311 = vpop.permute.xlu0 %310
    %v313 = vmul.f32 %v297, %v306
    %v314 = vmul.f32 %v298, %v306
    %v315 = vmul.f32 %v299, %v311
    %v316 = vmul.f32 %v300, %v311
    %s317 = scalar_lea.vmem %s2, 16
    %v318 = vld [vmem:[%s317] sm:$0xff]
    %v319 = vld [vmem:[%s317 + $0x8] sm:$0xf]
    %321 = vset.pattern.permute.xlu0 0
    %322 = vperm.xlu0 %321, %v318
    %v323 = vpop.permute.xlu0 %322
    %326 = vset.pattern.permute.xlu0 0
    %327 = vperm.xlu0 %326, %v319
    %v328 = vpop.permute.xlu0 %327
    %v330 = vadd.f32 %v313, %v323
    %v331 = vadd.f32 %v314, %v323
    %v332 = vadd.f32 %v315, %v328
    %v333 = vadd.f32 %v316, %v328
    %334 = vst [vmem:[#allocation7] sm:$0xff] %v330
    %335 = vst [vmem:[#allocation7 + $0x8] sm:$0xff] %v331
    %336 = vst [vmem:[#allocation7 + $0x10] sm:$0xf] %v332
    %337 = vst [vmem:[#allocation7 + $0x18] sm:$0xf] %v333
    // Predicated region
    $region22: #{tpu_custom_call.1} parent=1 // pred_check
      _
    $region23: #{tpu_custom_call.1} parent=1 // pred_check_branch
      %339 = sbr.rel (0) target = $region25
    $region24: #{tpu_custom_call.1} parent=1 // pred_region
      %s341 = ssub.s32 512, 512
      %342 = vsyncadd [#allocation4], %s341
      %s343 = sshll.u32 [#allocation7], 4
      %s344 = int_to_ptr.vmem [resolvable:$true] %s343
      %349 = dma.vmem_to_hbm [thread:$0]  %s344, 512, %s3, [#allocation4], 256, 256, 16
    $region25: #{tpu_custom_call.1} parent=1 // pred_fallthru
      _
    // Predicated region
    $region26: #{tpu_custom_call.1} parent=1 // pred_check
      _
    $region27: #{tpu_custom_call.1} parent=1 // pred_check_branch
      %351 = sbr.rel (0) target = $region29
    $region28: #{tpu_custom_call.1} parent=1 // pred_region
      %352 = dma.done [#allocation4], 512
    $region29: #{tpu_custom_call.1} parent=1 // pred_fallthru
      _
    %353 = vsyncpa [#allocation3], 1
    %354 = vsyncpa [#allocation6], 1
    %355 = vsyncpa [#allocation4], 1

</llo_original>
